<compile_context>
chip_gen: v7x
topology: tpu7x:2x2x1
jax: 0.10.0
libtpu: 0.0.40
codegen_flags: <defaults>
</compile_context>

<pallas_src>
import jax
import jax.numpy as jnp
from jax.experimental import pallas as pl
from jax.experimental.pallas import tpu as pltpu


def _cdiv(a, b):
    return -(-a // b)


def _round_up(x, m):
    return ((x + m - 1) // m) * m


def _sublane_multiple(dtype):
    itemsize = jnp.dtype(dtype).itemsize
    if itemsize == 2:
        return 16
    if itemsize == 1:
        return 32
    return 8


def _choose_batch_tile(B, block_b, m, min_tiles):
    """Pick (tile_rows, num_tiles) for the batch axis.

    Prefers (a) as few grid steps as possible, (b) at least `min_tiles` steps
    (so v7x's two TensorCores both get work), (c) sublane-multiple tiles for
    the active dtype.  A single full-extent tile (nt == 1) is exempt from the
    (8,128) divisibility rule, so it is returned as-is with no padding.
    """
    nt = max(min_tiles, _cdiv(B, block_b))
    nt = min(nt, _cdiv(B, m))            # never go below one sublane group/tile
    if nt <= 1:
        return B, 1                      # one full-extent block
    tb = _round_up(_cdiv(B, nt), m)
    return tb, _cdiv(B, tb)


def _pad_last(x, target):
    pad = target - x.shape[-1]
    if pad == 0:
        return x
    cfg = [(0, 0)] * (x.ndim - 1) + [(0, pad)]
    return jnp.pad(x, cfg)


def _pad_hidden_lanes(params):
    """Zero-pad fc1/fc2 up to 128-lane multiples.  Exactly numerics-preserving:
    padded W1/b1 columns relu to 0, padded W2 rows/cols contribute 0, padded wq
    entries are 0, so q is unchanged."""
    w1s, w1a, b1, w2, b2, wq, bq = params
    fc1, fc2 = w2.shape[-2], w2.shape[-1]
    fc1_p, fc2_p = _round_up(fc1, 128), _round_up(fc2, 128)
    if fc1_p == fc1 and fc2_p == fc2:
        return params
    w1s = _pad_last(w1s, fc1_p)
    w1a = _pad_last(w1a, fc1_p)
    b1 = _pad_last(b1, fc1_p)
    w2 = jnp.pad(w2, [(0, 0)] * (w2.ndim - 2)
                 + [(0, fc1_p - fc1), (0, fc2_p - fc2)])
    b2 = _pad_last(b2, fc2_p)
    wq = _pad_last(wq, fc2_p)
    return (w1s, w1a, b1, w2, b2, wq, bq)


def critic_kernel(state_ref, action_ref,
                  w1s_ref, w1a_ref, b1_ref,
                  w2_ref, b2_ref,
                  wq_ref, bq_ref,
                  q_ref):
    # fc1 on concatenated [state, action] (concat folded into two matmuls),
    # f32 accumulation regardless of the MXU input dtype.
    h1 = (jnp.dot(state_ref[...], w1s_ref[...], preferred_element_type=jnp.float32)
          + jnp.dot(action_ref[...], w1a_ref[...], preferred_element_type=jnp.float32)
          + b1_ref[...])
    h1 = jnp.maximum(h1, 0.0)                                    # relu (f32 VPU)

    # fc2: cast to the weight dtype only at the dot boundary (bf16 MXU path);
    # elementwise work stays f32 (v5e-safe).
    h2 = jnp.dot(h1.astype(w2_ref.dtype), w2_ref[...],
                 preferred_element_type=jnp.float32) + b2_ref[...]
    h2 = jnp.maximum(h2, 0.0)                                    # relu (f32 VPU)

    # q head: N=1 matmul replaced by VPU multiply + lane reduction (XLU).
    q = jnp.sum(h2 * wq_ref[...], axis=-1, keepdims=True) + bq_ref[...]
    q_ref[...] = q.astype(q_ref.dtype)


def critic_forward_ensemble(state, action, params, *, block_b=4096,
                            mxu_dtype=None, min_parallel_steps=2,
                            pad_lanes=True):
    """Run A critics in one fused kernel.

    state:  (B, input_dims)           shared by all agents
    action: (B, n_agents*n_actions)   shared by all agents
    params: tuple of 7 arrays, each with a leading agent axis A:
            w1s (A,Ds,fc1), w1a (A,Da,fc1), b1 (A,1,fc1),
            w2 (A,fc1,fc2), b2 (A,1,fc2), wq (A,1,fc2), bq (A,1,1)
    mxu_dtype: None for the PyTorch-faithful f32 path, or jnp.bfloat16 for the
            bf16-MXU fast path (valid on v5e/v6e/v7x; elementwise stays f32).
    returns q: (A, B, 1) float32

    Tip: stack critic + target-critic (or twin Q heads) along the agent axis to
    amortize the per-call launch / pipeline warmup cost.
    """
    if pad_lanes:
        params = _pad_hidden_lanes(params)
    w1s, w1a, b1, w2, b2, wq, bq = params

    A = w1s.shape[0]
    B, d_s = state.shape
    d_a = action.shape[1]
    fc1 = w1s.shape[2]
    fc2 = w2.shape[2]

    # Optional bf16 MXU inputs: halves activation/weight DMA bytes and runs the
    # MXU at native bf16 rate; biases / wq / bq stay f32.
    if mxu_dtype is not None:
        state = state.astype(mxu_dtype)
        action = action.astype(mxu_dtype)
        w1s, w1a, w2 = (x.astype(mxu_dtype) for x in (w1s, w1a, w2))

    # Batch tiling: dtype-aware sublane multiple; large tiles (few grid steps);
    # >= 2 total parallel steps for v7x when A == 1; ragged last block handled
    # by Pallas partial-block masking (no wrapper-side jnp.pad of activations).
    m = _sublane_multiple(state.dtype)
    min_tiles = 1 if A >= min_parallel_steps else min_parallel_steps
    tb, nt = _choose_batch_tile(B, block_b, m, min_tiles)

    # Batch OUTER, agent INNER: state/action blocks stay VMEM-resident across
    # the agent loop; only the tiny per-agent weights are re-fetched per step.
    grid = (nt, A)

    def data_spec(d):
        return pl.BlockSpec((tb, d), lambda i, a: (i, 0))

    def w_spec(r, c):
        # agent dim squeezed; constant across the batch axis.
        return pl.BlockSpec((None, r, c), lambda i, a: (a, 0, 0))

    q = pl.pallas_call(
        critic_kernel,
        out_shape=jax.ShapeDtypeStruct((A, B, 1), jnp.float32),
        grid=grid,
        in_specs=[data_spec(d_s), data_spec(d_a),
                  w_spec(d_s, fc1), w_spec(d_a, fc1), w_spec(1, fc1),
                  w_spec(fc1, fc2), w_spec(1, fc2),
                  w_spec(1, fc2), w_spec(1, 1)],
        out_specs=pl.BlockSpec((None, tb, 1), lambda i, a: (a, i, 0)),
        compiler_params=pltpu.CompilerParams(
            dimension_semantics=("parallel", "parallel")),
    )(state, action, w1s, w1a, b1, w2, b2, wq, bq)

    return q


def critic_forward(state, action, params, *, block_b=4096, mxu_dtype=None,
                   min_parallel_steps=2):
    """Single critic: state (B,Ds), action (B,Da) -> q (B,1)."""
    stacked = tuple(p[None] for p in params)
    q = critic_forward_ensemble(state, action, stacked, block_b=block_b,
                                mxu_dtype=mxu_dtype,
                                min_parallel_steps=min_parallel_steps)
    return q[0]


def init_params(key, input_dims, fc1_dims, fc2_dims, n_agents, n_actions):
    """Deterministic PyTorch-default-style init (uniform +-1/sqrt(fan_in))."""
    d_act = n_agents * n_actions
    d_in = input_dims + d_act
    ks = jax.random.split(key, 6)

    def unif(k, shape, fan_in):
        bound = 1.0 / jnp.sqrt(float(fan_in))
        return jax.random.uniform(k, shape, jnp.float32, -bound, bound)

    w1 = unif(ks[0], (d_in, fc1_dims), d_in)
    b1 = unif(ks[1], (1, fc1_dims), d_in)
    w2 = unif(ks[2], (fc1_dims, fc2_dims), fc1_dims)
    b2 = unif(ks[3], (1, fc2_dims), fc1_dims)
    wq = unif(ks[4], (1, fc2_dims), fc2_dims)   # torch layout (out=1, in=fc2)
    bq = unif(ks[5], (1, 1), fc2_dims)

    # split W1 into state-rows / action-rows so the concat fuses into two matmuls
    w1s, w1a = w1[:input_dims], w1[input_dims:]
    return (w1s, w1a, b1, w2, b2, wq, bq)


def reference_forward(state, action, params):
    """Plain-JAX f32 reference mirroring the PyTorch module exactly."""
    w1s, w1a, b1, w2, b2, wq, bq = params
    w1 = jnp.concatenate([w1s, w1a], axis=0)
    x = jnp.concatenate([state, action], axis=1)
    h1 = jax.nn.relu(x @ w1 + b1)
    h2 = jax.nn.relu(h1 @ w2 + b2)
    return h2 @ wq.T + bq


def reference_forward_matched(state, action, params, mxu_dtype):
    """Reference performing the same dtype casts as the kernel's bf16 path."""
    w1s, w1a, b1, w2, b2, wq, bq = params
    if mxu_dtype is not None:
        state = state.astype(mxu_dtype)
        action = action.astype(mxu_dtype)
        w1s, w1a, w2 = (x.astype(mxu_dtype) for x in (w1s, w1a, w2))
    h1 = jax.nn.relu(jnp.dot(state, w1s, preferred_element_type=jnp.float32)
                     + jnp.dot(action, w1a, preferred_element_type=jnp.float32) + b1)
    h2 = jax.nn.relu(jnp.dot(h1.astype(w2.dtype), w2,
                             preferred_element_type=jnp.float32) + b2)
    return jnp.sum(h2 * wq, axis=-1, keepdims=True) + bq


if __name__ == "__main__":
    # Small shapes consistent with the module's forward.
    batch = 8
    input_dims = 32
    n_agents = 2
    n_actions = 4
    fc1_dims = 64
    fc2_dims = 32

    key = jax.random.PRNGKey(0)
    k_state, k_action, k_params = jax.random.split(key, 3)

    state = jax.random.normal(k_state, (batch, input_dims), jnp.float32)
    action = jax.random.normal(k_action, (batch, n_agents * n_actions), jnp.float32)
    params = init_params(k_params, input_dims, fc1_dims, fc2_dims, n_agents, n_actions)

    # 1) f32 path, single critic (PyTorch-faithful numerics, lane-padded hiddens).
    q = jax.block_until_ready(critic_forward(state, action, params))
    q_ref = reference_forward(state, action, params)
    assert q.shape == (batch, 1), q.shape
    assert jnp.allclose(q, q_ref, atol=1e-5, rtol=1e-5), (q, q_ref)

    # 2) bf16-MXU fast path (valid on v5e/v6e/v7x): bf16 dot inputs, f32 elsewhere.
    q_bf = jax.block_until_ready(
        critic_forward(state, action, params, mxu_dtype=jnp.bfloat16))
    q_ref_bf = reference_forward_matched(state, action, params, jnp.bfloat16)
    assert jnp.allclose(q_bf, q_ref_bf, atol=5e-3, rtol=5e-3), (q_bf, q_ref_bf)
    assert jnp.allclose(q_bf, q_ref, atol=1e-1, rtol=1e-1)

    # 3) fused agent ensemble + multi-tile batch grid, batch-outer/agent-inner
    #    iteration (tiny tile only to exercise the pipeline in the test).
    B2 = 24
    k1, k2, kp = jax.random.split(jax.random.PRNGKey(1), 3)
    state2 = jax.random.normal(k1, (B2, input_dims), jnp.float32)
    action2 = jax.random.normal(k2, (B2, n_agents * n_actions), jnp.float32)
    agent_keys = jax.random.split(kp, n_agents)
    per_agent = [init_params(k, input_dims, fc1_dims, fc2_dims, n_agents, n_actions)
                 for k in agent_keys]
    stacked = tuple(jnp.stack(ps) for ps in zip(*per_agent))
    q_ens = jax.block_until_ready(
        critic_forward_ensemble(state2, action2, stacked, block_b=8))
    assert q_ens.shape == (n_agents, B2, 1), q_ens.shape
    for a in range(n_agents):
        qa_ref = reference_forward(state2, action2, per_agent[a])
        assert jnp.allclose(q_ens[a], qa_ref, atol=1e-5, rtol=1e-5), a

    # 4) ragged batch (B not a multiple of the tile): no wrapper jnp.pad,
    #    Pallas masks the partial last block.
    B3 = 20
    k3, k4 = jax.random.split(jax.random.PRNGKey(2))
    state3 = jax.random.normal(k3, (B3, input_dims), jnp.float32)
    action3 = jax.random.normal(k4, (B3, n_agents * n_actions), jnp.float32)
    q_rag = jax.block_until_ready(
        critic_forward(state3, action3, params, block_b=8))
    q_rag_ref = reference_forward(state3, action3, params)
    assert q_rag.shape == (B3, 1), q_rag.shape
    assert jnp.allclose(q_rag, q_rag_ref, atol=1e-5, rtol=1e-5)

    # 5) bf16 multi-tile batch: exercises the 16-row (bf16) sublane rounding.
    B4 = 48
    k5, k6 = jax.random.split(jax.random.PRNGKey(3))
    state4 = jax.random.normal(k5, (B4, input_dims), jnp.float32)
    action4 = jax.random.normal(k6, (B4, n_agents * n_actions), jnp.float32)
    q_bf2 = jax.block_until_ready(
        critic_forward(state4, action4, params, block_b=16,
                       mxu_dtype=jnp.bfloat16))
    q_bf2_ref = reference_forward_matched(state4, action4, params, jnp.bfloat16)
    assert jnp.allclose(q_bf2, q_bf2_ref, atol=5e-3, rtol=5e-3)

    # TODO(synk): Adam optimizer state and checkpoint save/load from the module
    # are host-side concerns with no Pallas equivalent; only forward is kerneled.
    print("KERNEL_OK")
</pallas_src>

<mosaic_0001>
module attributes {stable_mosaic.version = 11 : i64} {
  func.func @critic_kernel(%arg0: i32, %arg1: i32, %arg2: memref<8x32xf32, #tpu.memory_space<vmem>>, %arg3: memref<8x8xf32, #tpu.memory_space<vmem>>, %arg4: memref<1x32x128xf32, #tpu.memory_space<vmem>>, %arg5: memref<1x8x128xf32, #tpu.memory_space<vmem>>, %arg6: memref<1x1x128xf32, #tpu.memory_space<vmem>>, %arg7: memref<1x128x128xf32, #tpu.memory_space<vmem>>, %arg8: memref<1x1x128xf32, #tpu.memory_space<vmem>>, %arg9: memref<1x1x128xf32, #tpu.memory_space<vmem>>, %arg10: memref<1x1x1xf32, #tpu.memory_space<vmem>>, %arg11: memref<1x8x1xf32, #tpu.memory_space<vmem>>) attributes {dimension_semantics = [#tpu.dimension_semantics<parallel>, #tpu.dimension_semantics<parallel>], iteration_bounds = array<i64: 1, 1>, scalar_prefetch = 0 : i64, scratch_operands = 0 : i64, tpu.core_type = #tpu.core_type<tc>, window_params = [{transform_indices = @transform_0, window_bounds = array<i64: 8, 32>}, {transform_indices = @transform_1, window_bounds = array<i64: 8, 8>}, {transform_indices = @transform_2, window_bounds = array<i64: 1, 32, 128>}, {transform_indices = @transform_3, window_bounds = array<i64: 1, 8, 128>}, {transform_indices = @transform_4, window_bounds = array<i64: 1, 1, 128>}, {transform_indices = @transform_5, window_bounds = array<i64: 1, 128, 128>}, {transform_indices = @transform_6, window_bounds = array<i64: 1, 1, 128>}, {transform_indices = @transform_7, window_bounds = array<i64: 1, 1, 128>}, {transform_indices = @transform_8, window_bounds = array<i64: 1, 1, 1>}, {transform_indices = @transform_9, window_bounds = array<i64: 1, 8, 1>}]} {
    %c0 = arith.constant 0 : index
    %c0_0 = arith.constant 0 : index
    %0 = vector.load %arg2[%c0, %c0_0] : memref<8x32xf32, #tpu.memory_space<vmem>>, vector<8x32xf32>
    %c0_1 = arith.constant 0 : index
    %c0_2 = arith.constant 0 : index
    %c0_3 = arith.constant 0 : index
    %1 = vector.load %arg4[%c0_1, %c0_2, %c0_3] : memref<1x32x128xf32, #tpu.memory_space<vmem>>, vector<1x32x128xf32>
    %2 = vector.shape_cast %1 : vector<1x32x128xf32> to vector<32x128xf32>
    %cst = arith.constant dense<0.000000e+00> : vector<8x128xf32>
    %3 = tpu.matmul %0, %2, %cst {dimension_numbers = #tpu.dot_dimension_numbers<[1], [0], [0], [1], [0, 0, 1, 1], [], []>} : vector<8x32xf32>, vector<32x128xf32>, vector<8x128xf32> -> vector<8x128xf32>
    %c0_4 = arith.constant 0 : index
    %c0_5 = arith.constant 0 : index
    %4 = vector.load %arg3[%c0_4, %c0_5] : memref<8x8xf32, #tpu.memory_space<vmem>>, vector<8x8xf32>
    %c0_6 = arith.constant 0 : index
    %c0_7 = arith.constant 0 : index
    %c0_8 = arith.constant 0 : index
    %5 = vector.load %arg5[%c0_6, %c0_7, %c0_8] : memref<1x8x128xf32, #tpu.memory_space<vmem>>, vector<1x8x128xf32>
    %6 = vector.shape_cast %5 : vector<1x8x128xf32> to vector<8x128xf32>
    %cst_9 = arith.constant dense<0.000000e+00> : vector<8x128xf32>
    %7 = tpu.matmul %4, %6, %cst_9 {dimension_numbers = #tpu.dot_dimension_numbers<[1], [0], [0], [1], [0, 0, 1, 1], [], []>} : vector<8x8xf32>, vector<8x128xf32>, vector<8x128xf32> -> vector<8x128xf32>
    %8 = arith.addf %3, %7 : vector<8x128xf32>
    %c0_10 = arith.constant 0 : index
    %c0_11 = arith.constant 0 : index
    %c0_12 = arith.constant 0 : index
    %9 = vector.load %arg6[%c0_10, %c0_11, %c0_12] : memref<1x1x128xf32, #tpu.memory_space<vmem>>, vector<1x1x128xf32>
    %10 = vector.shape_cast %9 : vector<1x1x128xf32> to vector<1x128xf32>
    %11 = vector.broadcast %10 : vector<1x128xf32> to vector<8x128xf32>
    %12 = arith.addf %8, %11 : vector<8x128xf32>
    %cst_13 = arith.constant 0.000000e+00 : f32
    %13 = vector.broadcast %cst_13 : f32 to vector<8x128xf32>
    %14 = arith.maximumf %12, %13 : vector<8x128xf32>
    %c0_14 = arith.constant 0 : index
    %c0_15 = arith.constant 0 : index
    %c0_16 = arith.constant 0 : index
    %15 = vector.load %arg7[%c0_14, %c0_15, %c0_16] : memref<1x128x128xf32, #tpu.memory_space<vmem>>, vector<1x128x128xf32>
    %16 = vector.shape_cast %15 : vector<1x128x128xf32> to vector<128x128xf32>
    %cst_17 = arith.constant dense<0.000000e+00> : vector<8x128xf32>
    %17 = tpu.matmul %14, %16, %cst_17 {dimension_numbers = #tpu.dot_dimension_numbers<[1], [0], [0], [1], [0, 0, 1, 1], [], []>} : vector<8x128xf32>, vector<128x128xf32>, vector<8x128xf32> -> vector<8x128xf32>
    %c0_18 = arith.constant 0 : index
    %c0_19 = arith.constant 0 : index
    %c0_20 = arith.constant 0 : index
    %18 = vector.load %arg8[%c0_18, %c0_19, %c0_20] : memref<1x1x128xf32, #tpu.memory_space<vmem>>, vector<1x1x128xf32>
    %19 = vector.shape_cast %18 : vector<1x1x128xf32> to vector<1x128xf32>
    %20 = vector.broadcast %19 : vector<1x128xf32> to vector<8x128xf32>
    %21 = arith.addf %17, %20 : vector<8x128xf32>
    %cst_21 = arith.constant 0.000000e+00 : f32
    %22 = vector.broadcast %cst_21 : f32 to vector<8x128xf32>
    %23 = arith.maximumf %21, %22 : vector<8x128xf32>
    %c0_22 = arith.constant 0 : index
    %c0_23 = arith.constant 0 : index
    %c0_24 = arith.constant 0 : index
    %24 = vector.load %arg9[%c0_22, %c0_23, %c0_24] : memref<1x1x128xf32, #tpu.memory_space<vmem>>, vector<1x1x128xf32>
    %25 = vector.shape_cast %24 : vector<1x1x128xf32> to vector<1x128xf32>
    %26 = vector.broadcast %25 : vector<1x128xf32> to vector<8x128xf32>
    %27 = arith.mulf %23, %26 : vector<8x128xf32>
    %cst_25 = arith.constant dense<0.000000e+00> : vector<8xf32>
    %28 = vector.multi_reduction <add>, %27, %cst_25 [1] : vector<8x128xf32> to vector<8xf32>
    %29 = vector.shape_cast %28 : vector<8xf32> to vector<8x1xf32>
    %c0_26 = arith.constant 0 : index
    %c0_27 = arith.constant 0 : index
    %c0_28 = arith.constant 0 : index
    %30 = vector.load %arg10[%c0_26, %c0_27, %c0_28] : memref<1x1x1xf32, #tpu.memory_space<vmem>>, vector<1x1x1xf32>
    %31 = vector.shape_cast %30 : vector<1x1x1xf32> to vector<1x1xf32>
    %32 = vector.broadcast %31 : vector<1x1xf32> to vector<8x1xf32>
    %33 = arith.addf %29, %32 : vector<8x1xf32>
    %c0_29 = arith.constant 0 : index
    %c0_30 = arith.constant 0 : index
    %c0_31 = arith.constant 0 : index
    %34 = vector.load %arg11[%c0_29, %c0_30, %c0_31] : memref<1x8x1xf32, #tpu.memory_space<vmem>>, vector<1x8x1xf32>
    %35 = vector.shape_cast %34 : vector<1x8x1xf32> to vector<8x1xf32>
    %36 = vector.shape_cast %33 : vector<8x1xf32> to vector<1x8x1xf32>
    tpu.vector_store %arg11[%c0_29, %c0_30, %c0_31], %36 {strides = array<i32>} : memref<1x8x1xf32, #tpu.memory_space<vmem>>, vector<1x8x1xf32>,
    return
  }
  func.func @transform_0(%arg0: i32, %arg1: i32) -> (i32, i32) {
    %c0_i32 = arith.constant 0 : i32
    %c0_i32_0 = arith.constant 0 : i32
    return %arg0, %c0_i32 : i32, i32
  }
  func.func @transform_1(%arg0: i32, %arg1: i32) -> (i32, i32) {
    %c0_i32 = arith.constant 0 : i32
    %c0_i32_0 = arith.constant 0 : i32
    return %arg0, %c0_i32 : i32, i32
  }
  func.func @transform_2(%arg0: i32, %arg1: i32) -> (i32, i32, i32) {
    %c0_i32 = arith.constant 0 : i32
    %c0_i32_0 = arith.constant 0 : i32
    %c0_i32_1 = arith.constant 0 : i32
    return %arg1, %c0_i32, %c0_i32_0 : i32, i32, i32
  }
  func.func @transform_3(%arg0: i32, %arg1: i32) -> (i32, i32, i32) {
    %c0_i32 = arith.constant 0 : i32
    %c0_i32_0 = arith.constant 0 : i32
    %c0_i32_1 = arith.constant 0 : i32
    return %arg1, %c0_i32, %c0_i32_0 : i32, i32, i32
  }
  func.func @transform_4(%arg0: i32, %arg1: i32) -> (i32, i32, i32) {
    %c0_i32 = arith.constant 0 : i32
    %c0_i32_0 = arith.constant 0 : i32
    %c0_i32_1 = arith.constant 0 : i32
    return %arg1, %c0_i32, %c0_i32_0 : i32, i32, i32
  }
  func.func @transform_5(%arg0: i32, %arg1: i32) -> (i32, i32, i32) {
    %c0_i32 = arith.constant 0 : i32
    %c0_i32_0 = arith.constant 0 : i32
    %c0_i32_1 = arith.constant 0 : i32
    return %arg1, %c0_i32, %c0_i32_0 : i32, i32, i32
  }
  func.func @transform_6(%arg0: i32, %arg1: i32) -> (i32, i32, i32) {
    %c0_i32 = arith.constant 0 : i32
    %c0_i32_0 = arith.constant 0 : i32
    %c0_i32_1 = arith.constant 0 : i32
    return %arg1, %c0_i32, %c0_i32_0 : i32, i32, i32
  }
  func.func @transform_7(%arg0: i32, %arg1: i32) -> (i32, i32, i32) {
    %c0_i32 = arith.constant 0 : i32
    %c0_i32_0 = arith.constant 0 : i32
    %c0_i32_1 = arith.constant 0 : i32
    return %arg1, %c0_i32, %c0_i32_0 : i32, i32, i32
  }
  func.func @transform_8(%arg0: i32, %arg1: i32) -> (i32, i32, i32) {
    %c0_i32 = arith.constant 0 : i32
    %c0_i32_0 = arith.constant 0 : i32
    %c0_i32_1 = arith.constant 0 : i32
    return %arg1, %c0_i32, %c0_i32_0 : i32, i32, i32
  }
  func.func @transform_9(%arg0: i32, %arg1: i32) -> (i32, i32, i32) {
    %c0_i32 = arith.constant 0 : i32
    %c0_i32_0 = arith.constant 0 : i32
    return %arg1, %arg0, %c0_i32 : i32, i32, i32
  }
}

</mosaic_0001>

<llo_original>
// kernel: tpu_custom_call.1
$region0: #{tpu_custom_call.1}
  #allocation0 [shape = 'u32[]', space=smem, size = 0x4, offset = 0x4, fixed_abs, tag = 'smem constant byte address 0x4 - core index']
  #allocation1 [shape = 'u32[144,128]{1,0:T(1,128)}', space=vmem, size = 0x12000, scoped, tag = 'internal scratch']
  #allocation2 [shape = 'f32[1,1,1]{2,1,0:T(1,128)S(1)}', space=vmem, size = 0x200, scoped, tag = 'scoped memory for tpu_custom_call.1']
  %s0 = inlined_call_operand.hbm [shape: f32[8,32], index: 0, kind: input, shape index: {}]
  %s1 = inlined_call_operand.hbm [shape: f32[8,8], index: 1, kind: input, shape index: {}]
  %s2 = inlined_call_operand.hbm [shape: f32[1,32,128], index: 2, kind: input, shape index: {}]
  %s3 = inlined_call_operand.vmem [shape: f32[1,8,128], index: 3, kind: input, shape index: {}]
  %s4 = inlined_call_operand.vmem [shape: f32[1,1,128], index: 4, kind: input, shape index: {}]
  %s5 = inlined_call_operand.hbm [shape: f32[1,128,128], index: 5, kind: input, shape index: {}]
  %s6 = inlined_call_operand.vmem [shape: f32[1,1,128], index: 6, kind: input, shape index: {}]
  %s7 = inlined_call_operand.vmem [shape: f32[1,1,128], index: 7, kind: input, shape index: {}]
  %s8 = inlined_call_operand.<no memory space> [shape: f32[1,1,1], index: 8, kind: input, shape index: {}]
  %s9 = inlined_call_operand.vmem [shape: f32[1,8,1], index: 9, kind: output, shape index: {}]
  %s10 = sld [smem:[#allocation0]]
  $region62: #{tpu_custom_call.1} parent=0
    _
  %s12 = ssub.s32 1, %s10
  %s13 = scalar_select 0, %s12, %s10
  %v14 = vstv %s8
  %15 = vst [vmem:[#allocation2] sm:$0x1] %v14
  $region1: #{tpu_custom_call.1} parent=0
    #allocation3 [shape = 'u8[4096]{0}', space=vmem, size = 0x1000, scoped, tag = 'input window, operand 0, single buffered']
    #allocation4 [shape = 's32[1]{0}', space=sflag, size = 0x4, scoped, tag = 'scoped memory for tpu_custom_call.1']
    #allocation5 [shape = 'u8[4096]{0}', space=vmem, size = 0x1000, scoped, tag = 'input window, operand 1, single buffered']
    #allocation6 [shape = 's32[1]{0}', space=sflag, size = 0x4, scoped, tag = 'scoped memory for tpu_custom_call.1']
    #allocation7 [shape = 'u8[16384]{0}', space=vmem, size = 0x4000, scoped, tag = 'input window, operand 2, single buffered']
    #allocation8 [shape = 'u8[65536]{0}', space=vmem, size = 0x10000, scoped, tag = 'input window, operand 5, single buffered']
    #allocation9 [shape = 's32[1]{0}', space=sflag, size = 0x4, scoped, tag = 'scoped memory for tpu_custom_call.1']
    %16 = vsyncpa [#allocation4], 0
    %17 = vsyncpa [#allocation6], 0
    %18 = vsyncpa [#allocation9], 0
    // Predicated region
    $region2: #{tpu_custom_call.1} parent=1 // pred_check
      _
    $region3: #{tpu_custom_call.1} parent=1 // pred_check_branch
      %20 = sbr.rel (0) target = $region5
    $region4: #{tpu_custom_call.1} parent=1 // pred_region
      %s22 = ssub.s32 128, 128
      %23 = vsyncadd [#allocation4], %s22
      %s25 = sshll.u32 [#allocation3], 4
      %s26 = int_to_ptr.vmem [resolvable:$true] %s25
      %28 = dma.hbm_to_vmem [thread:$0]  %s0, 128, %s26, [#allocation4]
    $region5: #{tpu_custom_call.1} parent=1 // pred_fallthru
      _
    // Predicated region
    $region6: #{tpu_custom_call.1} parent=1 // pred_check
      _
    $region7: #{tpu_custom_call.1} parent=1 // pred_check_branch
      %30 = sbr.rel (0) target = $region9
    $region8: #{tpu_custom_call.1} parent=1 // pred_region
      %s32 = ssub.s32 128, 128
      %33 = vsyncadd [#allocation6], %s32
      %s35 = sshll.u32 [#allocation5], 4
      %s36 = int_to_ptr.vmem [resolvable:$true] %s35
      %38 = dma.hbm_to_vmem [thread:$0]  %s1, 128, %s36, [#allocation6]
    $region9: #{tpu_custom_call.1} parent=1 // pred_fallthru
      _
    // Predicated region
    $region10: #{tpu_custom_call.1} parent=1 // pred_check
      _
    $region11: #{tpu_custom_call.1} parent=1 // pred_check_branch
      %40 = sbr.rel (0) target = $region13
    $region12: #{tpu_custom_call.1} parent=1 // pred_region
      %s42 = ssub.s32 512, 512
      %43 = vsyncadd [#allocation6], %s42
      %s44 = sshll.u32 [#allocation7], 4
      %s45 = int_to_ptr.vmem [resolvable:$true] %s44
      %50 = dma.hbm_to_vmem [thread:$0]  %s2, 512, %s45, [#allocation6], 128, 128, 8
    $region13: #{tpu_custom_call.1} parent=1 // pred_fallthru
      _
    // Predicated region
    $region14: #{tpu_custom_call.1} parent=1 // pred_check
      _
    $region15: #{tpu_custom_call.1} parent=1 // pred_check_branch
      %52 = sbr.rel (0) target = $region17
    $region16: #{tpu_custom_call.1} parent=1 // pred_region
      _
    $region17: #{tpu_custom_call.1} parent=1 // pred_fallthru
      _
    // Predicated region
    $region18: #{tpu_custom_call.1} parent=1 // pred_check
      _
    $region19: #{tpu_custom_call.1} parent=1 // pred_check_branch
      %54 = sbr.rel (0) target = $region21
    $region20: #{tpu_custom_call.1} parent=1 // pred_region
      _
    $region21: #{tpu_custom_call.1} parent=1 // pred_fallthru
      _
    // Predicated region
    $region22: #{tpu_custom_call.1} parent=1 // pred_check
      _
    $region23: #{tpu_custom_call.1} parent=1 // pred_check_branch
      %56 = sbr.rel (0) target = $region25
    $region24: #{tpu_custom_call.1} parent=1 // pred_region
      %s58 = ssub.s32 2048, 2048
      %59 = vsyncadd [#allocation9], %s58
      %s60 = sshll.u32 [#allocation8], 4
      %s61 = int_to_ptr.vmem [resolvable:$true] %s60
      %66 = dma.hbm_to_vmem [thread:$0]  %s5, 2048, %s61, [#allocation9], 128, 128, 8
    $region25: #{tpu_custom_call.1} parent=1 // pred_fallthru
      _
    // Predicated region
    $region26: #{tpu_custom_call.1} parent=1 // pred_check
      _
    $region27: #{tpu_custom_call.1} parent=1 // pred_check_branch
      %68 = sbr.rel (0) target = $region29
    $region28: #{tpu_custom_call.1} parent=1 // pred_region
      _
    $region29: #{tpu_custom_call.1} parent=1 // pred_fallthru
      _
    // Predicated region
    $region30: #{tpu_custom_call.1} parent=1 // pred_check
      _
    $region31: #{tpu_custom_call.1} parent=1 // pred_check_branch
      %70 = sbr.rel (0) target = $region33
    $region32: #{tpu_custom_call.1} parent=1 // pred_region
      _
    $region33: #{tpu_custom_call.1} parent=1 // pred_fallthru
      _
    // Predicated region
    $region34: #{tpu_custom_call.1} parent=1 // pred_check
      _
    $region35: #{tpu_custom_call.1} parent=1 // pred_check_branch
      %72 = sbr.rel (0) target = $region37
    $region36: #{tpu_custom_call.1} parent=1 // pred_region
      _
    $region37: #{tpu_custom_call.1} parent=1 // pred_fallthru
      _
    // Predicated region
    $region38: #{tpu_custom_call.1} parent=1 // pred_check
      _
    $region39: #{tpu_custom_call.1} parent=1 // pred_check_branch
      %74 = sbr.rel (0) target = $region41
    $region40: #{tpu_custom_call.1} parent=1 // pred_region
      %75 = dma.done [#allocation4], 128
    $region41: #{tpu_custom_call.1} parent=1 // pred_fallthru
      _
    // Predicated region
    $region42: #{tpu_custom_call.1} parent=1 // pred_check
      _
    $region43: #{tpu_custom_call.1} parent=1 // pred_check_branch
      %77 = sbr.rel (0) target = $region45
    $region44: #{tpu_custom_call.1} parent=1 // pred_region
      %78 = dma.done [#allocation6], 128
    $region45: #{tpu_custom_call.1} parent=1 // pred_fallthru
      _
    // Predicated region
    $region46: #{tpu_custom_call.1} parent=1 // pred_check
      _
    $region47: #{tpu_custom_call.1} parent=1 // pred_check_branch
      %80 = sbr.rel (0) target = $region49
    $region48: #{tpu_custom_call.1} parent=1 // pred_region
      %81 = dma.done [#allocation6], 512
    $region49: #{tpu_custom_call.1} parent=1 // pred_fallthru
      _
    // Predicated region
    $region50: #{tpu_custom_call.1} parent=1 // pred_check
      _
    $region51: #{tpu_custom_call.1} parent=1 // pred_check_branch
      %83 = sbr.rel (0) target = $region53
    $region52: #{tpu_custom_call.1} parent=1 // pred_region
      %84 = dma.done [#allocation9], 2048
    $region53: #{tpu_custom_call.1} parent=1 // pred_fallthru
      _
    %v85 = vld [vmem:[#allocation3] sm:$0xff]
    %v86 = vld [vmem:[#allocation7] sm:$0xff]
    %v87 = vld [vmem:[#allocation7 + $0x8] sm:$0xff]
    %v88 = vld [vmem:[#allocation7 + $0x10] sm:$0xff]
    %v89 = vld [vmem:[#allocation7 + $0x18] sm:$0xff]
    %v90 = vld [vmem:[#allocation5] sm:$0xff]
    %v91 = vld [vmem:[%s3] sm:$0xff]
    %vm92 = vcmask 64512
    %v94 = vsel %vm92, %v90, 0
    %96 = vmatprep.subr.mxu0 0.0
    %97 = vmatpush1.msra.mxu0 %v91
    %98 = vmatprep.subr.mxu0 0.0
    %99 = vmatpush1.msra.mxu0 0.0
    %100 = vmatprep.subr.mxu0 0.0
    %101 = vmatpush1.msra.mxu0 0.0
    %102 = vmatprep.subr.mxu0 0.0
    %103 = vmatpush1.msra.mxu0 0.0
    %104 = vmatprep.subr.mxu0 0.0
    %105 = vmatpush1.msra.mxu0 0.0
    %106 = vmatprep.subr.mxu0 0.0
    %107 = vmatpush1.msra.mxu0 0.0
    %108 = vmatprep.subr.mxu0 0.0
    %109 = vmatpush1.msra.mxu0 0.0
    %110 = vmatprep.subr.mxu0 0.0
    %111 = vmatpush1.msra.mxu0 0.0
    %112 = vmatprep.subr.mxu0 0.0
    %113 = vmatpush1.msra.mxu0 0.0
    %114 = vmatprep.subr.mxu0 0.0
    %115 = vmatpush1.msra.mxu0 0.0
    %116 = vmatprep.subr.mxu0 0.0
    %117 = vmatpush1.msra.mxu0 0.0
    %118 = vmatprep.subr.mxu0 0.0
    %119 = vmatpush1.msra.mxu0 0.0
    %120 = vmatprep.subr.mxu0 0.0
    %121 = vmatpush1.msra.mxu0 0.0
    %122 = vmatprep.subr.mxu0 0.0
    %123 = vmatpush1.msra.mxu0 0.0
    %124 = vmatprep.subr.mxu0 0.0
    %125 = vmatpush1.msra.mxu0 0.0
    %126 = vmatprep.subr.mxu0 0.0
    %127 = vmatpush1.msra.mxu0 0.0
    %128 = vmatprep.subr.mxu0 0.0
    %129 = vmatpush1.msra.mxu0 0.0
    %130 = vmatprep.subr.mxu0 0.0
    %131 = vmatpush1.msra.mxu0 0.0
    %132 = vmatprep.subr.mxu0 0.0
    %133 = vmatpush1.msra.mxu0 0.0
    %134 = vmatprep.subr.mxu0 0.0
    %135 = vmatpush1.msra.mxu0 0.0
    %136 = vmatprep.subr.mxu0 0.0
    %137 = vmatpush1.msra.mxu0 0.0
    %138 = vmatprep.subr.mxu0 0.0
    %139 = vmatpush1.msra.mxu0 0.0
    %140 = vmatprep.subr.mxu0 0.0
    %141 = vmatpush1.msra.mxu0 0.0
    %142 = vmatprep.subr.mxu0 0.0
    %143 = vmatpush1.msra.mxu0 0.0
    %144 = vmatprep.subr.mxu0 0.0
    %145 = vmatpush1.msra.mxu0 0.0
    %146 = vmatprep.subr.mxu0 0.0
    %147 = vmatpush1.msra.mxu0 0.0
    %148 = vmatprep.subr.mxu0 0.0
    %149 = vmatpush1.msra.mxu0 0.0
    %150 = vmatprep.subr.mxu0 0.0
    %151 = vmatpush1.msra.mxu0 0.0
    %152 = vmatprep.subr.mxu0 0.0
    %153 = vmatpush1.msra.mxu0 0.0
    %154 = vmatprep.subr.mxu0 0.0
    %155 = vmatpush1.msra.mxu0 0.0
    %156 = vmatprep.subr.mxu0 0.0
    %157 = vmatpush1.msra.mxu0 0.0
    %158 = vmatprep.subr.mxu0 0.0
    %159 = vmatpush1.msra.mxu0 0.0
    %160 = vmatprep.mubr.f32.mxu0 0.0
    %161 = vmatmul.mubr.f32.gmra.mrb[0].mxu0 %v94
    %v162 = vpop.f32.mrb[0].mxu0
    %v163 = vadd.f32 0.0, %v162
    %v164 = vpop.f32.mrb[0].mxu0
    %165 = vdwg.mxu0
    %vm166 = vcmask 261120
    %v168 = vsel %vm166, %v85, 0
    %170 = vmatprep.subr.mxu0 0.0
    %171 = vmatpush1.msra.mxu0 %v86
    %172 = vmatprep.subr.mxu0 0.0
    %173 = vmatpush1.msra.mxu0 %v87
    %174 = vmatprep.subr.mxu0 0.0
    %175 = vmatpush1.msra.mxu0 %v88
    %176 = vmatprep.subr.mxu0 0.0
    %177 = vmatpush1.msra.mxu0 %v89
    %178 = vmatprep.subr.mxu0 0.0
    %179 = vmatpush1.msra.mxu0 0.0
    %180 = vmatprep.subr.mxu0 0.0
    %181 = vmatpush1.msra.mxu0 0.0
    %182 = vmatprep.subr.mxu0 0.0
    %183 = vmatpush1.msra.mxu0 0.0
    %184 = vmatprep.subr.mxu0 0.0
    %185 = vmatpush1.msra.mxu0 0.0
    %186 = vmatprep.subr.mxu0 0.0
    %187 = vmatpush1.msra.mxu0 0.0
    %188 = vmatprep.subr.mxu0 0.0
    %189 = vmatpush1.msra.mxu0 0.0
    %190 = vmatprep.subr.mxu0 0.0
    %191 = vmatpush1.msra.mxu0 0.0
    %192 = vmatprep.subr.mxu0 0.0
    %193 = vmatpush1.msra.mxu0 0.0
    %194 = vmatprep.subr.mxu0 0.0
    %195 = vmatpush1.msra.mxu0 0.0
    %196 = vmatprep.subr.mxu0 0.0
    %197 = vmatpush1.msra.mxu0 0.0
    %198 = vmatprep.subr.mxu0 0.0
    %199 = vmatpush1.msra.mxu0 0.0
    %200 = vmatprep.subr.mxu0 0.0
    %201 = vmatpush1.msra.mxu0 0.0
    %202 = vmatprep.subr.mxu0 0.0
    %203 = vmatpush1.msra.mxu0 0.0
    %204 = vmatprep.subr.mxu0 0.0
    %205 = vmatpush1.msra.mxu0 0.0
    %206 = vmatprep.subr.mxu0 0.0
    %207 = vmatpush1.msra.mxu0 0.0
    %208 = vmatprep.subr.mxu0 0.0
    %209 = vmatpush1.msra.mxu0 0.0
    %210 = vmatprep.subr.mxu0 0.0
    %211 = vmatpush1.msra.mxu0 0.0
    %212 = vmatprep.subr.mxu0 0.0
    %213 = vmatpush1.msra.mxu0 0.0
    %214 = vmatprep.subr.mxu0 0.0
    %215 = vmatpush1.msra.mxu0 0.0
    %216 = vmatprep.subr.mxu0 0.0
    %217 = vmatpush1.msra.mxu0 0.0
    %218 = vmatprep.subr.mxu0 0.0
    %219 = vmatpush1.msra.mxu0 0.0
    %220 = vmatprep.subr.mxu0 0.0
    %221 = vmatpush1.msra.mxu0 0.0
    %222 = vmatprep.subr.mxu0 0.0
    %223 = vmatpush1.msra.mxu0 0.0
    %224 = vmatprep.subr.mxu0 0.0
    %225 = vmatpush1.msra.mxu0 0.0
    %226 = vmatprep.subr.mxu0 0.0
    %227 = vmatpush1.msra.mxu0 0.0
    %228 = vmatprep.subr.mxu0 0.0
    %229 = vmatpush1.msra.mxu0 0.0
    %230 = vmatprep.subr.mxu0 0.0
    %231 = vmatpush1.msra.mxu0 0.0
    %232 = vmatprep.subr.mxu0 0.0
    %233 = vmatpush1.msra.mxu0 0.0
    %234 = vmatprep.mubr.f32.mxu0 0.0
    %235 = vmatmul.mubr.f32.gmra.mrb[0].mxu0 %v168
    %v236 = vpop.f32.mrb[0].mxu0
    %v237 = vadd.f32 %v163, %v236
    %v238 = vpop.f32.mrb[0].mxu0
    %239 = vdwg.mxu0
    %v240 = vld [vmem:[%s4] sm:$0x1]
    %v242 = vlaneseq
    %v243 = vshrl.u32 %v242, 7
    %v244 = vsub.s32 0, %v243
    %v245 = vrot.slane %v240, %v244
    %v247 = vadd.f32 %v237, %v245
    %v248 = vmax.f32 %v247, 0.0
    %v249 = vld [vmem:[#allocation8] sm:$0xff]
    %v250 = vld [vmem:[#allocation8 + $0x8] sm:$0xff]
    %v251 = vld [vmem:[#allocation8 + $0x10] sm:$0xff]
    %v252 = vld [vmem:[#allocation8 + $0x18] sm:$0xff]
    %v253 = vld [vmem:[#allocation8 + $0x20] sm:$0xff]
    %v254 = vld [vmem:[#allocation8 + $0x28] sm:$0xff]
    %v255 = vld [vmem:[#allocation8 + $0x30] sm:$0xff]
    %v256 = vld [vmem:[#allocation8 + $0x38] sm:$0xff]
    %v257 = vld [vmem:[#allocation8 + $0x40] sm:$0xff]
    %v258 = vld [vmem:[#allocation8 + $0x48] sm:$0xff]
    %v259 = vld [vmem:[#allocation8 + $0x50] sm:$0xff]
    %v260 = vld [vmem:[#allocation8 + $0x58] sm:$0xff]
    %v261 = vld [vmem:[#allocation8 + $0x60] sm:$0xff]
    %v262 = vld [vmem:[#allocation8 + $0x68] sm:$0xff]
    %v263 = vld [vmem:[#allocation8 + $0x70] sm:$0xff]
    %v264 = vld [vmem:[#allocation8 + $0x78] sm:$0xff]
    %v265 = vld [vmem:[%s6] sm:$0x1]
    %v267 = vlaneseq
    %v268 = vshrl.u32 %v267, 7
    %v269 = vsub.s32 0, %v268
    %v270 = vrot.slane %v265, %v269
    %272 = vmatprep.subr.mxu0 0.0
    %273 = vmatpush1.msra.mxu0 %v249
    %274 = vmatprep.subr.mxu0 0.0
    %275 = vmatpush1.msra.mxu0 %v250
    %276 = vmatprep.subr.mxu0 0.0
    %277 = vmatpush1.msra.mxu0 %v251
    %278 = vmatprep.subr.mxu0 0.0
    %279 = vmatpush1.msra.mxu0 %v252
    %280 = vmatprep.subr.mxu0 0.0
    %281 = vmatpush1.msra.mxu0 %v253
    %282 = vmatprep.subr.mxu0 0.0
    %283 = vmatpush1.msra.mxu0 %v254
    %284 = vmatprep.subr.mxu0 0.0
    %285 = vmatpush1.msra.mxu0 %v255
    %286 = vmatprep.subr.mxu0 0.0
    %287 = vmatpush1.msra.mxu0 %v256
    %288 = vmatprep.subr.mxu0 0.0
    %289 = vmatpush1.msra.mxu0 %v257
    %290 = vmatprep.subr.mxu0 0.0
    %291 = vmatpush1.msra.mxu0 %v258
    %292 = vmatprep.subr.mxu0 0.0
    %293 = vmatpush1.msra.mxu0 %v259
    %294 = vmatprep.subr.mxu0 0.0
    %295 = vmatpush1.msra.mxu0 %v260
    %296 = vmatprep.subr.mxu0 0.0
    %297 = vmatpush1.msra.mxu0 %v261
    %298 = vmatprep.subr.mxu0 0.0
    %299 = vmatpush1.msra.mxu0 %v262
    %300 = vmatprep.subr.mxu0 0.0
    %301 = vmatpush1.msra.mxu0 %v263
    %302 = vmatprep.subr.mxu0 0.0
    %303 = vmatpush1.msra.mxu0 %v264
    %304 = vmatprep.subr.mxu0 0.0
    %305 = vmatpush1.msra.mxu0 0.0
    %306 = vmatprep.subr.mxu0 0.0
    %307 = vmatpush1.msra.mxu0 0.0
    %308 = vmatprep.subr.mxu0 0.0
    %309 = vmatpush1.msra.mxu0 0.0
    %310 = vmatprep.subr.mxu0 0.0
    %311 = vmatpush1.msra.mxu0 0.0
    %312 = vmatprep.subr.mxu0 0.0
    %313 = vmatpush1.msra.mxu0 0.0
    %314 = vmatprep.subr.mxu0 0.0
    %315 = vmatpush1.msra.mxu0 0.0
    %316 = vmatprep.subr.mxu0 0.0
    %317 = vmatpush1.msra.mxu0 0.0
    %318 = vmatprep.subr.mxu0 0.0
    %319 = vmatpush1.msra.mxu0 0.0
    %320 = vmatprep.subr.mxu0 0.0
    %321 = vmatpush1.msra.mxu0 0.0
    %322 = vmatprep.subr.mxu0 0.0
    %323 = vmatpush1.msra.mxu0 0.0
    %324 = vmatprep.subr.mxu0 0.0
    %325 = vmatpush1.msra.mxu0 0.0
    %326 = vmatprep.subr.mxu0 0.0
    %327 = vmatpush1.msra.mxu0 0.0
    %328 = vmatprep.subr.mxu0 0.0
    %329 = vmatpush1.msra.mxu0 0.0
    %330 = vmatprep.subr.mxu0 0.0
    %331 = vmatpush1.msra.mxu0 0.0
    %332 = vmatprep.subr.mxu0 0.0
    %333 = vmatpush1.msra.mxu0 0.0
    %334 = vmatprep.subr.mxu0 0.0
    %335 = vmatpush1.msra.mxu0 0.0
    %336 = vmatprep.mubr.f32.mxu0 0.0
    %337 = vmatmul.mubr.f32.gmra.mrb[0].mxu0 %v248
    %v338 = vpop.f32.mrb[0].mxu0
    %v339 = vadd.f32 %v270, %v338
    %v340 = vpop.f32.mrb[0].mxu0
    %341 = vdwg.mxu0
    %v342 = vmax.f32 %v339, 0.0
    %v343 = vld [vmem:[%s7] sm:$0x1]
    %v345 = vlaneseq
    %v346 = vshrl.u32 %v345, 7
    %v347 = vsub.s32 0, %v346
    %v348 = vrot.slane %v343, %v347
    %v350 = vmul.f32 %v342, %v348
    %351 = vadd.xlane.f32.xlu0 %v350
    %v352 = vpop.xlane.xlu0 %351
    %v353 = vld [vmem:[#allocation2] sm:$0x1]
    %v355 = vlaneseq
    %v356 = vshrl.u32 %v355, 7
    %v357 = vsub.s32 0, %v356
    %v358 = vrot.slane %v353, %v357
    %v360 = vadd.f32 %v352, %v358
    %vm361 = vcmask 7168
    %362 = vst.msk [vmem:[%s9] sm:$0xff] %vm361, %v360
    // Predicated region
    $region54: #{tpu_custom_call.1} parent=1 // pred_check
      _
    $region55: #{tpu_custom_call.1} parent=1 // pred_check_branch
      %364 = sbr.rel (0) target = $region57
    $region56: #{tpu_custom_call.1} parent=1 // pred_region
      _
    $region57: #{tpu_custom_call.1} parent=1 // pred_fallthru
      _
    // Predicated region
    $region58: #{tpu_custom_call.1} parent=1 // pred_check
      _
    $region59: #{tpu_custom_call.1} parent=1 // pred_check_branch
      %366 = sbr.rel (0) target = $region61
    $region60: #{tpu_custom_call.1} parent=1 // pred_region
      _
    $region61: #{tpu_custom_call.1} parent=1 // pred_fallthru
      _
    %367 = vsyncpa [#allocation4], 1
    %368 = vsyncpa [#allocation6], 1
    %369 = vsyncpa [#allocation9], 1

</llo_original>
